<compile_context>
chip_gen: v5e
topology: v5e:2x2
jax: 0.10.0
libtpu: 0.0.40
codegen_flags: <defaults>
</compile_context>

<pallas_src>
import functools

import jax
import jax.numpy as jnp
from jax.experimental import pallas as pl
from jax.experimental.pallas import tpu as pltpu

# Layer sizes from the PyTorch module.
FIRST_HIDDEN_LAYER = 100
SECOND_HIDDEN_LAYER = 50
OUTPUT_SIZE = 10

LANE = 128
SUBLANE = 8
H_PAD = 128          # both hidden layers padded to 128
OUT_PAD = 128        # lane-dense output slab
NEG_PAD = -1e30      # "minus infinity" for padded logit columns
MAX_TILE_B = 1024    # batch tile (multiple of 8, sized for v5e/v7x VMEM too)


def _round_up(x, m):
    return ((x + m - 1) // m) * m


def firstnet_kernel(x_ref,
                    w0_ref, b0_ref,
                    w1_ref, b1_ref,
                    w2_ref, b2_ref,
                    out_ref):
    """Fused forward for one batch tile:
       relu(x@W0+b0) -> relu(.@W1+b1) -> .@W2+b2 -> log_softmax (128 lanes)."""
    x = x_ref[...]  # (TILE_B, IN_PAD), possibly bf16

    # Layer 0 (bf16 operands allowed; f32 accumulation on the MXU).
    h = jnp.dot(x, w0_ref[...], preferred_element_type=jnp.float32)
    h = jnp.maximum(h + b0_ref[...], 0.0)

    # Layer 1 (f32).
    h = jnp.dot(h, w1_ref[...], preferred_element_type=jnp.float32)
    h = jnp.maximum(h + b1_ref[...], 0.0)

    # Layer 2 (f32).  Padding columns of b2 are -1e30, so after the bias add
    # the padded logits are effectively -inf and drop out of the softmax sums.
    logits = jnp.dot(h, w2_ref[...], preferred_element_type=jnp.float32)
    logits = logits + b2_ref[...]

    # log_softmax over the full 128 lanes (padding lanes contribute exp(.)=0,
    # so the result on the first 10 lanes matches a 10-wide log_softmax).
    m = jnp.max(logits, axis=-1, keepdims=True)
    shifted = logits - m
    lse = jnp.log(jnp.sum(jnp.exp(shifted), axis=-1, keepdims=True))
    out_ref[...] = shifted - lse


def firstnet_forward(x, params, *, tile_b=MAX_TILE_B, use_bf16_first_layer=True):
    """x: anything that flattens to (B, image_size); params: [(W0,b0),(W1,b1),(W2,b2)]
    with W in (in, out) layout.  Returns (B, OUTPUT_SIZE) f32 log-probs."""
    (w0, b0), (w1, b1), (w2, b2) = params
    image_size = w0.shape[0]

    x2d = jnp.reshape(x, (-1, image_size)).astype(jnp.float32)
    B = x2d.shape[0]

    # --- pad feature / batch dims for clean (8, 128) layout -----------------
    in_pad = _round_up(image_size, LANE)
    x2d = jnp.pad(x2d, ((0, 0), (0, in_pad - image_size)))

    tile_b = min(tile_b, _round_up(B, SUBLANE))
    num_tiles = pl.cdiv(B, tile_b)
    b_pad = num_tiles * tile_b
    x2d = jnp.pad(x2d, ((0, b_pad - B), (0, 0)))

    # --- pad parameters ------------------------------------------------------
    def pad_w(w, rows, cols):
        w = w.astype(jnp.float32)
        return jnp.pad(w, ((0, rows - w.shape[0]), (0, cols - w.shape[1])))

    def pad_b(b, cols, fill=0.0):
        b = b.astype(jnp.float32).reshape(1, -1)
        return jnp.pad(b, ((0, 0), (0, cols - b.shape[1])), constant_values=fill)

    w0p = pad_w(w0, in_pad, H_PAD)
    b0p = pad_b(b0, H_PAD)                       # zeros -> relu keeps pad cols at 0
    w1p = pad_w(w1, H_PAD, H_PAD)
    b1p = pad_b(b1, H_PAD)
    w2p = pad_w(w2, H_PAD, OUT_PAD)
    b2p = pad_b(b2, OUT_PAD, fill=NEG_PAD)       # padded logits -> -1e30

    if use_bf16_first_layer:
        # Halve HBM traffic on the dominant stream (x); MXU accumulates in f32.
        x2d = x2d.astype(jnp.bfloat16)
        w0p = w0p.astype(jnp.bfloat16)

    # --- grid / specs ---------------------------------------------------------
    grid = (num_tiles,)
    const = lambda i: (0, 0)  # weights/biases stay VMEM-resident across steps

    in_specs = [
        pl.BlockSpec((tile_b, in_pad), lambda i: (i, 0)),   # x tile (pipelined)
        pl.BlockSpec((in_pad, H_PAD), const),
        pl.BlockSpec((1, H_PAD), const),
        pl.BlockSpec((H_PAD, H_PAD), const),
        pl.BlockSpec((1, H_PAD), const),
        pl.BlockSpec((H_PAD, OUT_PAD), const),
        pl.BlockSpec((1, OUT_PAD), const),
    ]
    out_specs = pl.BlockSpec((tile_b, OUT_PAD), lambda i: (i, 0))

    x_bytes = x2d.size * x2d.dtype.itemsize
    w_bytes = sum(a.size * a.dtype.itemsize for a in (w0p, b0p, w1p, b1p, w2p, b2p))
    out_bytes = b_pad * OUT_PAD * 4
    cost = pl.CostEstimate(
        flops=2 * b_pad * (in_pad * H_PAD + H_PAD * H_PAD + H_PAD * OUT_PAD),
        transcendentals=b_pad * (OUT_PAD + 1),
        bytes_accessed=x_bytes + w_bytes + out_bytes,
    )

    out_padded = pl.pallas_call(
        firstnet_kernel,
        out_shape=jax.ShapeDtypeStruct((b_pad, OUT_PAD), jnp.float32),
        grid=grid,
        in_specs=in_specs,
        out_specs=out_specs,
        compiler_params=pltpu.CompilerParams(
            dimension_semantics=("parallel",),
        ),
        cost_estimate=cost,
    )(x2d, w0p, b0p, w1p, b1p, w2p, b2p)

    return out_padded[:B, :OUTPUT_SIZE]


def init_params(key, image_size):
    """PyTorch nn.Linear-style uniform init; W stored as (in, out)."""
    sizes = [image_size, FIRST_HIDDEN_LAYER, SECOND_HIDDEN_LAYER, OUTPUT_SIZE]
    params = []
    for i in range(len(sizes) - 1):
        fan_in, fan_out = sizes[i], sizes[i + 1]
        key, kw, kb = jax.random.split(key, 3)
        bound = 1.0 / jnp.sqrt(fan_in)
        w = jax.random.uniform(kw, (fan_in, fan_out), jnp.float32, -bound, bound)
        b = jax.random.uniform(kb, (fan_out,), jnp.float32, -bound, bound)
        params.append((w, b))
    return params


def reference_forward(x, params, *, use_bf16_first_layer=True):
    """Pure-JAX reference with the same first-layer bf16 semantics."""
    (w0, b0), (w1, b1), (w2, b2) = params
    h = jnp.reshape(x, (-1, w0.shape[0])).astype(jnp.float32)
    if use_bf16_first_layer:
        h = jnp.dot(h.astype(jnp.bfloat16), w0.astype(jnp.bfloat16),
                    preferred_element_type=jnp.float32)
    else:
        h = jnp.dot(h, w0, preferred_element_type=jnp.float32)
    h = jnp.maximum(h + b0, 0.0)
    h = jnp.maximum(jnp.dot(h, w1, preferred_element_type=jnp.float32) + b1, 0.0)
    logits = jnp.dot(h, w2, preferred_element_type=jnp.float32) + b2
    return jax.nn.log_softmax(logits, axis=1)


if __name__ == "__main__":
    key = jax.random.PRNGKey(0)
    k_x, k_p = jax.random.split(key)

    # Small MNIST-like input: NCHW (2, 1, 16, 16) -> image_size = 256
    x = jax.random.normal(k_x, (2, 1, 16, 16), dtype=jnp.float32)
    image_size = 1 * 16 * 16

    params = init_params(k_p, image_size)

    fwd = jax.jit(functools.partial(firstnet_forward, use_bf16_first_layer=True))
    out = jax.block_until_ready(fwd(x, params))

    ref = reference_forward(x, params, use_bf16_first_layer=True)
    assert out.shape == (2, OUTPUT_SIZE)
    assert jnp.allclose(out, ref, atol=1e-3, rtol=1e-3), "mismatch vs JAX reference"

    print("KERNEL_OK")
</pallas_src>

<mosaic_0001>
module attributes {stable_mosaic.version = 11 : i64} {
  func.func @firstnet_kernel(%arg0: i32, %arg1: memref<8x256xbf16, #tpu.memory_space<vmem>>, %arg2: memref<256x128xbf16, #tpu.memory_space<vmem>>, %arg3: memref<1x128xf32, #tpu.memory_space<vmem>>, %arg4: memref<128x128xf32, #tpu.memory_space<vmem>>, %arg5: memref<1x128xf32, #tpu.memory_space<vmem>>, %arg6: memref<128x128xf32, #tpu.memory_space<vmem>>, %arg7: memref<1x128xf32, #tpu.memory_space<vmem>>, %arg8: memref<8x128xf32, #tpu.memory_space<vmem>>) attributes {dimension_semantics = [#tpu.dimension_semantics<parallel>], iteration_bounds = array<i64: 1>, scalar_prefetch = 0 : i64, scratch_operands = 0 : i64, tpu.core_type = #tpu.core_type<tc>, window_params = [{transform_indices = @transform_0, window_bounds = array<i64: 8, 256>}, {pipeline_mode = #tpu.pipeline_mode<synchronous>, transform_indices = @transform_1, window_bounds = array<i64: 256, 128>}, {pipeline_mode = #tpu.pipeline_mode<synchronous>, transform_indices = @transform_2, window_bounds = array<i64: 1, 128>}, {pipeline_mode = #tpu.pipeline_mode<synchronous>, transform_indices = @transform_3, window_bounds = array<i64: 128, 128>}, {pipeline_mode = #tpu.pipeline_mode<synchronous>, transform_indices = @transform_4, window_bounds = array<i64: 1, 128>}, {pipeline_mode = #tpu.pipeline_mode<synchronous>, transform_indices = @transform_5, window_bounds = array<i64: 128, 128>}, {pipeline_mode = #tpu.pipeline_mode<synchronous>, transform_indices = @transform_6, window_bounds = array<i64: 1, 128>}, {transform_indices = @transform_7, window_bounds = array<i64: 8, 128>}]} {
    %c0 = arith.constant 0 : index
    %c0_0 = arith.constant 0 : index
    %0 = vector.load %arg1[%c0, %c0_0] : memref<8x256xbf16, #tpu.memory_space<vmem>>, vector<8x256xbf16>
    %c0_1 = arith.constant 0 : index
    %c0_2 = arith.constant 0 : index
    %1 = vector.load %arg2[%c0_1, %c0_2] : memref<256x128xbf16, #tpu.memory_space<vmem>>, vector<256x128xbf16>
    %cst = arith.constant dense<0.000000e+00> : vector<8x128xf32>
    %2 = tpu.matmul %0, %1, %cst {dimension_numbers = #tpu.dot_dimension_numbers<[1], [0], [0], [1], [0, 0, 1, 1], [], []>} : vector<8x256xbf16>, vector<256x128xbf16>, vector<8x128xf32> -> vector<8x128xf32>
    %c0_3 = arith.constant 0 : index
    %c0_4 = arith.constant 0 : index
    %3 = vector.load %arg3[%c0_3, %c0_4] : memref<1x128xf32, #tpu.memory_space<vmem>>, vector<1x128xf32>
    %4 = vector.broadcast %3 : vector<1x128xf32> to vector<8x128xf32>
    %5 = arith.addf %2, %4 : vector<8x128xf32>
    %cst_5 = arith.constant 0.000000e+00 : f32
    %6 = vector.broadcast %cst_5 : f32 to vector<8x128xf32>
    %7 = arith.maximumf %5, %6 : vector<8x128xf32>
    %c0_6 = arith.constant 0 : index
    %c0_7 = arith.constant 0 : index
    %8 = vector.load %arg4[%c0_6, %c0_7] : memref<128x128xf32, #tpu.memory_space<vmem>>, vector<128x128xf32>
    %cst_8 = arith.constant dense<0.000000e+00> : vector<8x128xf32>
    %9 = tpu.matmul %7, %8, %cst_8 {dimension_numbers = #tpu.dot_dimension_numbers<[1], [0], [0], [1], [0, 0, 1, 1], [], []>} : vector<8x128xf32>, vector<128x128xf32>, vector<8x128xf32> -> vector<8x128xf32>
    %c0_9 = arith.constant 0 : index
    %c0_10 = arith.constant 0 : index
    %10 = vector.load %arg5[%c0_9, %c0_10] : memref<1x128xf32, #tpu.memory_space<vmem>>, vector<1x128xf32>
    %11 = vector.broadcast %10 : vector<1x128xf32> to vector<8x128xf32>
    %12 = arith.addf %9, %11 : vector<8x128xf32>
    %cst_11 = arith.constant 0.000000e+00 : f32
    %13 = vector.broadcast %cst_11 : f32 to vector<8x128xf32>
    %14 = arith.maximumf %12, %13 : vector<8x128xf32>
    %c0_12 = arith.constant 0 : index
    %c0_13 = arith.constant 0 : index
    %15 = vector.load %arg6[%c0_12, %c0_13] : memref<128x128xf32, #tpu.memory_space<vmem>>, vector<128x128xf32>
    %cst_14 = arith.constant dense<0.000000e+00> : vector<8x128xf32>
    %16 = tpu.matmul %14, %15, %cst_14 {dimension_numbers = #tpu.dot_dimension_numbers<[1], [0], [0], [1], [0, 0, 1, 1], [], []>} : vector<8x128xf32>, vector<128x128xf32>, vector<8x128xf32> -> vector<8x128xf32>
    %c0_15 = arith.constant 0 : index
    %c0_16 = arith.constant 0 : index
    %17 = vector.load %arg7[%c0_15, %c0_16] : memref<1x128xf32, #tpu.memory_space<vmem>>, vector<1x128xf32>
    %18 = vector.broadcast %17 : vector<1x128xf32> to vector<8x128xf32>
    %19 = arith.addf %16, %18 : vector<8x128xf32>
    %cst_17 = arith.constant dense<0xFF800000> : vector<8xf32>
    %20 = vector.multi_reduction <maximumf>, %19, %cst_17 [1] : vector<8x128xf32> to vector<8xf32>
    %21 = vector.shape_cast %20 : vector<8xf32> to vector<8x1xf32>
    %22 = vector.broadcast %21 : vector<8x1xf32> to vector<8x128xf32>
    %23 = arith.subf %19, %22 : vector<8x128xf32>
    %24 = math.exp %23 : vector<8x128xf32>
    %cst_18 = arith.constant dense<0.000000e+00> : vector<8xf32>
    %25 = vector.multi_reduction <add>, %24, %cst_18 [1] : vector<8x128xf32> to vector<8xf32>
    %26 = vector.shape_cast %25 : vector<8xf32> to vector<8x1xf32>
    %27 = math.log %26 : vector<8x1xf32>
    %28 = vector.broadcast %27 : vector<8x1xf32> to vector<8x128xf32>
    %29 = arith.subf %23, %28 : vector<8x128xf32>
    %c0_19 = arith.constant 0 : index
    %c0_20 = arith.constant 0 : index
    %30 = vector.load %arg8[%c0_19, %c0_20] : memref<8x128xf32, #tpu.memory_space<vmem>>, vector<8x128xf32>
    tpu.vector_store %arg8[%c0_19, %c0_20], %29 {strides = array<i32>} : memref<8x128xf32, #tpu.memory_space<vmem>>, vector<8x128xf32>,
    return
  }
  func.func @transform_0(%arg0: i32) -> (i32, i32) {
    %c0_i32 = arith.constant 0 : i32
    %c0_i32_0 = arith.constant 0 : i32
    return %arg0, %c0_i32 : i32, i32
  }
  func.func @transform_1(%arg0: i32) -> (i32, i32) {
    %c0_i32 = arith.constant 0 : i32
    %c0_i32_0 = arith.constant 0 : i32
    %c0_i32_1 = arith.constant 0 : i32
    return %c0_i32, %c0_i32_0 : i32, i32
  }
  func.func @transform_2(%arg0: i32) -> (i32, i32) {
    %c0_i32 = arith.constant 0 : i32
    %c0_i32_0 = arith.constant 0 : i32
    %c0_i32_1 = arith.constant 0 : i32
    return %c0_i32, %c0_i32_0 : i32, i32
  }
  func.func @transform_3(%arg0: i32) -> (i32, i32) {
    %c0_i32 = arith.constant 0 : i32
    %c0_i32_0 = arith.constant 0 : i32
    %c0_i32_1 = arith.constant 0 : i32
    return %c0_i32, %c0_i32_0 : i32, i32
  }
  func.func @transform_4(%arg0: i32) -> (i32, i32) {
    %c0_i32 = arith.constant 0 : i32
    %c0_i32_0 = arith.constant 0 : i32
    %c0_i32_1 = arith.constant 0 : i32
    return %c0_i32, %c0_i32_0 : i32, i32
  }
  func.func @transform_5(%arg0: i32) -> (i32, i32) {
    %c0_i32 = arith.constant 0 : i32
    %c0_i32_0 = arith.constant 0 : i32
    %c0_i32_1 = arith.constant 0 : i32
    return %c0_i32, %c0_i32_0 : i32, i32
  }
  func.func @transform_6(%arg0: i32) -> (i32, i32) {
    %c0_i32 = arith.constant 0 : i32
    %c0_i32_0 = arith.constant 0 : i32
    %c0_i32_1 = arith.constant 0 : i32
    return %c0_i32, %c0_i32_0 : i32, i32
  }
  func.func @transform_7(%arg0: i32) -> (i32, i32) {
    %c0_i32 = arith.constant 0 : i32
    %c0_i32_0 = arith.constant 0 : i32
    return %arg0, %c0_i32 : i32, i32
  }
}

</mosaic_0001>

<llo_original>
// kernel: firstnet_forward.1
$region0: #{firstnet_forward.1}
  #allocation0 [shape = 'u32[]', space=smem, size = 0x4, offset = 0x4, fixed_abs, tag = 'smem constant byte address 0x4 - core index']
  #allocation1 [shape = 'u32[72,128]{1,0:T(1,128)}', space=vmem, size = 0x9000, scoped, tag = 'internal scratch']
  %s0 = inlined_call_operand.vmem [shape: bf16[8,256], index: 0, kind: input, shape index: {}]
  %s1 = inlined_call_operand.vmem [shape: bf16[256,128], index: 1, kind: input, shape index: {}]
  %s2 = inlined_call_operand.vmem [shape: f32[1,128], index: 2, kind: input, shape index: {}]
  %s3 = inlined_call_operand.vmem [shape: f32[128,128], index: 3, kind: input, shape index: {}]
  %s4 = inlined_call_operand.vmem [shape: f32[1,128], index: 4, kind: input, shape index: {}]
  %s5 = inlined_call_operand.vmem [shape: f32[128,128], index: 5, kind: input, shape index: {}]
  %s6 = inlined_call_operand.vmem [shape: f32[1,128], index: 6, kind: input, shape index: {}]
  %s7 = inlined_call_operand.vmem [shape: f32[8,128], index: 7, kind: output, shape index: {}]
  %s8 = sld [smem:[#allocation0]]
  $region38: #{firstnet_forward.1} parent=0
    _
  %s10 = ssub.s32 1, %s8
  %s11 = scalar_select 0, %s10, %s8
  // Predicated region
  $region2: #{firstnet_forward.1} parent=0 // pred_check
    _
  $region3: #{firstnet_forward.1} parent=0 // pred_check_branch
    %13 = sbr.rel (0) target = $region5
  $region4: #{firstnet_forward.1} parent=0 // pred_region
    _
  $region5: #{firstnet_forward.1} parent=0 // pred_fallthru
    _
  // Predicated region
  $region6: #{firstnet_forward.1} parent=0 // pred_check
    _
  $region7: #{firstnet_forward.1} parent=0 // pred_check_branch
    %15 = sbr.rel (0) target = $region9
  $region8: #{firstnet_forward.1} parent=0 // pred_region
    _
  $region9: #{firstnet_forward.1} parent=0 // pred_fallthru
    _
  // Predicated region
  $region10: #{firstnet_forward.1} parent=0 // pred_check
    _
  $region11: #{firstnet_forward.1} parent=0 // pred_check_branch
    %17 = sbr.rel (0) target = $region13
  $region12: #{firstnet_forward.1} parent=0 // pred_region
    _
  $region13: #{firstnet_forward.1} parent=0 // pred_fallthru
    _
  // Predicated region
  $region14: #{firstnet_forward.1} parent=0 // pred_check
    _
  $region15: #{firstnet_forward.1} parent=0 // pred_check_branch
    %19 = sbr.rel (0) target = $region17
  $region16: #{firstnet_forward.1} parent=0 // pred_region
    _
  $region17: #{firstnet_forward.1} parent=0 // pred_fallthru
    _
  // Predicated region
  $region18: #{firstnet_forward.1} parent=0 // pred_check
    _
  $region19: #{firstnet_forward.1} parent=0 // pred_check_branch
    %21 = sbr.rel (0) target = $region21
  $region20: #{firstnet_forward.1} parent=0 // pred_region
    _
  $region21: #{firstnet_forward.1} parent=0 // pred_fallthru
    _
  // Predicated region
  $region22: #{firstnet_forward.1} parent=0 // pred_check
    _
  $region23: #{firstnet_forward.1} parent=0 // pred_check_branch
    %23 = sbr.rel (0) target = $region25
  $region24: #{firstnet_forward.1} parent=0 // pred_region
    _
  $region25: #{firstnet_forward.1} parent=0 // pred_fallthru
    _
  // Predicated region
  $region26: #{firstnet_forward.1} parent=0 // pred_check
    _
  $region27: #{firstnet_forward.1} parent=0 // pred_check_branch
    %25 = sbr.rel (0) target = $region29
  $region28: #{firstnet_forward.1} parent=0 // pred_region
    _
  $region29: #{firstnet_forward.1} parent=0 // pred_fallthru
    _
  %v26 = vld [vmem:[%s0] sm:$0xff]
  %v27 = vld [vmem:[%s1] sm:$0xf]
  %v28 = vld [vmem:[%s1 + $0x4] sm:$0xf]
  %v29 = vld [vmem:[%s1 + $0x8] sm:$0xf]
  %v30 = vld [vmem:[%s1 + $0xc] sm:$0xf]
  %v31 = vld [vmem:[%s1 + $0x10] sm:$0xf]
  %v32 = vld [vmem:[%s1 + $0x14] sm:$0xf]
  %v33 = vld [vmem:[%s1 + $0x18] sm:$0xf]
  %v34 = vld [vmem:[%s1 + $0x1c] sm:$0xf]
  %v35 = vld [vmem:[%s1 + $0x20] sm:$0xf]
  %v36 = vld [vmem:[%s1 + $0x24] sm:$0xf]
  %v37 = vld [vmem:[%s1 + $0x28] sm:$0xf]
  %v38 = vld [vmem:[%s1 + $0x2c] sm:$0xf]
  %v39 = vld [vmem:[%s1 + $0x30] sm:$0xf]
  %v40 = vld [vmem:[%s1 + $0x34] sm:$0xf]
  %v41 = vld [vmem:[%s1 + $0x38] sm:$0xf]
  %v42 = vld [vmem:[%s1 + $0x3c] sm:$0xf]
  %v43 = vld [vmem:[%s1 + $0x40] sm:$0xf]
  %v44 = vld [vmem:[%s1 + $0x44] sm:$0xf]
  %v45 = vld [vmem:[%s1 + $0x48] sm:$0xf]
  %v46 = vld [vmem:[%s1 + $0x4c] sm:$0xf]
  %v47 = vld [vmem:[%s1 + $0x50] sm:$0xf]
  %v48 = vld [vmem:[%s1 + $0x54] sm:$0xf]
  %v49 = vld [vmem:[%s1 + $0x58] sm:$0xf]
  %v50 = vld [vmem:[%s1 + $0x5c] sm:$0xf]
  %v51 = vld [vmem:[%s1 + $0x60] sm:$0xf]
  %v52 = vld [vmem:[%s1 + $0x64] sm:$0xf]
  %v53 = vld [vmem:[%s1 + $0x68] sm:$0xf]
  %v54 = vld [vmem:[%s1 + $0x6c] sm:$0xf]
  %v55 = vld [vmem:[%s1 + $0x70] sm:$0xf]
  %v56 = vld [vmem:[%s1 + $0x74] sm:$0xf]
  %v57 = vld [vmem:[%s1 + $0x78] sm:$0xf]
  %v58 = vld [vmem:[%s1 + $0x7c] sm:$0xf]
  %v59 = vld [vmem:[%s2] sm:$0x1]
  %v61 = vperm.slane %v59, 0
  %v64 = vunpack.c.l.b16 %v26
  %v65 = vunpack.c.h.b16 %v26
  %v66 = vpack.c.b16 %v64, %v64
  %v67 = vpack.c.b16 %v65, %v65
  %v102 = vunpack.c.l.b16 %v27
  %v103 = vunpack.c.l.b16 %v28
  %v104 = vunpack.c.l.b16 %v29
  %v105 = vunpack.c.l.b16 %v30
  %v106 = vunpack.c.l.b16 %v31
  %v107 = vunpack.c.l.b16 %v32
  %v108 = vunpack.c.l.b16 %v33
  %v109 = vunpack.c.l.b16 %v34
  %v110 = vunpack.c.l.b16 %v35
  %v111 = vunpack.c.l.b16 %v36
  %v112 = vunpack.c.l.b16 %v37
  %v113 = vunpack.c.l.b16 %v38
  %v114 = vunpack.c.l.b16 %v39
  %v115 = vunpack.c.l.b16 %v40
  %v116 = vunpack.c.l.b16 %v41
  %v117 = vunpack.c.l.b16 %v42
  %v118 = vunpack.c.l.b16 %v43
  %v119 = vunpack.c.l.b16 %v44
  %v120 = vunpack.c.l.b16 %v45
  %v121 = vunpack.c.l.b16 %v46
  %v122 = vunpack.c.l.b16 %v47
  %v123 = vunpack.c.l.b16 %v48
  %v124 = vunpack.c.l.b16 %v49
  %v125 = vunpack.c.l.b16 %v50
  %v126 = vunpack.c.l.b16 %v51
  %v127 = vunpack.c.l.b16 %v52
  %v128 = vunpack.c.l.b16 %v53
  %v129 = vunpack.c.l.b16 %v54
  %v130 = vunpack.c.l.b16 %v55
  %v131 = vunpack.c.l.b16 %v56
  %v132 = vunpack.c.l.b16 %v57
  %v133 = vunpack.c.l.b16 %v58
  %v134 = vpack.c.b16 %v103, %v102
  %v135 = vpack.c.b16 %v105, %v104
  %v136 = vpack.c.b16 %v107, %v106
  %v137 = vpack.c.b16 %v109, %v108
  %v138 = vpack.c.b16 %v111, %v110
  %v139 = vpack.c.b16 %v113, %v112
  %v140 = vpack.c.b16 %v115, %v114
  %v141 = vpack.c.b16 %v117, %v116
  %v142 = vpack.c.b16 %v119, %v118
  %v143 = vpack.c.b16 %v121, %v120
  %v144 = vpack.c.b16 %v123, %v122
  %v145 = vpack.c.b16 %v125, %v124
  %v146 = vpack.c.b16 %v127, %v126
  %v147 = vpack.c.b16 %v129, %v128
  %v148 = vpack.c.b16 %v131, %v130
  %v149 = vpack.c.b16 %v133, %v132
  %166 = vmatpush.bf16.msra.mxu0 %v141
  %167 = vmatpush.bf16.msra.mxu0 %v140
  %168 = vmatpush.bf16.msra.mxu0 %v139
  %169 = vmatpush.bf16.msra.mxu0 %v138
  %170 = vmatpush.bf16.msra.mxu0 %v137
  %171 = vmatpush.bf16.msra.mxu0 %v136
  %172 = vmatpush.bf16.msra.mxu0 %v135
  %173 = vmatpush.bf16.msra.mxu0 %v134
  %174 = vmatmul.bf16.gmra.mxu0 %v66
  %v175 = vpop.f32.mrf.mxu0
  %v176 = vadd.f32 %v61, %v175
  %v177 = vpop.f32.mrf.mxu0
  %178 = vdwg.mxu0
  %179 = vmatpush.bf16.msra.mxu0 %v149
  %180 = vmatpush.bf16.msra.mxu0 %v148
  %181 = vmatpush.bf16.msra.mxu0 %v147
  %182 = vmatpush.bf16.msra.mxu0 %v146
  %183 = vmatpush.bf16.msra.mxu0 %v145
  %184 = vmatpush.bf16.msra.mxu0 %v144
  %185 = vmatpush.bf16.msra.mxu0 %v143
  %186 = vmatpush.bf16.msra.mxu0 %v142
  %187 = vmatmul.bf16.gmra.mxu0 %v67
  %v188 = vpop.f32.mrf.mxu0
  %v189 = vadd.f32 %v176, %v188
  %v190 = vpop.f32.mrf.mxu0
  %191 = vdwg.mxu0
  %v192 = vmax.f32 %v189, 0.0
  %v193 = vld [vmem:[%s3] sm:$0xff]
  %v194 = vld [vmem:[%s3 + $0x8] sm:$0xff]
  %v195 = vld [vmem:[%s3 + $0x10] sm:$0xff]
  %v196 = vld [vmem:[%s3 + $0x18] sm:$0xff]
  %v197 = vld [vmem:[%s3 + $0x20] sm:$0xff]
  %v198 = vld [vmem:[%s3 + $0x28] sm:$0xff]
  %v199 = vld [vmem:[%s3 + $0x30] sm:$0xff]
  %v200 = vld [vmem:[%s3 + $0x38] sm:$0xff]
  %v201 = vld [vmem:[%s3 + $0x40] sm:$0xff]
  %v202 = vld [vmem:[%s3 + $0x48] sm:$0xff]
  %v203 = vld [vmem:[%s3 + $0x50] sm:$0xff]
  %v204 = vld [vmem:[%s3 + $0x58] sm:$0xff]
  %v205 = vld [vmem:[%s3 + $0x60] sm:$0xff]
  %v206 = vld [vmem:[%s3 + $0x68] sm:$0xff]
  %v207 = vld [vmem:[%s3 + $0x70] sm:$0xff]
  %v208 = vld [vmem:[%s3 + $0x78] sm:$0xff]
  %v209 = vld [vmem:[%s4] sm:$0x1]
  %v211 = vperm.slane %v209, 0
  %213 = vmatpush.msra.mxu0 %v208
  %214 = vmatpush.msra.mxu0 %v207
  %215 = vmatpush.msra.mxu0 %v206
  %216 = vmatpush.msra.mxu0 %v205
  %217 = vmatpush.msra.mxu0 %v204
  %218 = vmatpush.msra.mxu0 %v203
  %219 = vmatpush.msra.mxu0 %v202
  %220 = vmatpush.msra.mxu0 %v201
  %221 = vmatpush.msra.mxu0 %v200
  %222 = vmatpush.msra.mxu0 %v199
  %223 = vmatpush.msra.mxu0 %v198
  %224 = vmatpush.msra.mxu0 %v197
  %225 = vmatpush.msra.mxu0 %v196
  %226 = vmatpush.msra.mxu0 %v195
  %227 = vmatpush.msra.mxu0 %v194
  %228 = vmatpush.msra.mxu0 %v193
  %229 = vmatmul.f32.gmra.mxu0 %v192
  %v230 = vpop.f32.mrf.mxu0
  %v231 = vadd.f32 %v211, %v230
  %232 = vdwg.mxu0
  %v233 = vmax.f32 %v231, 0.0
  %v234 = vld [vmem:[%s5] sm:$0xff]
  %v235 = vld [vmem:[%s5 + $0x8] sm:$0xff]
  %v236 = vld [vmem:[%s5 + $0x10] sm:$0xff]
  %v237 = vld [vmem:[%s5 + $0x18] sm:$0xff]
  %v238 = vld [vmem:[%s5 + $0x20] sm:$0xff]
  %v239 = vld [vmem:[%s5 + $0x28] sm:$0xff]
  %v240 = vld [vmem:[%s5 + $0x30] sm:$0xff]
  %v241 = vld [vmem:[%s5 + $0x38] sm:$0xff]
  %v242 = vld [vmem:[%s5 + $0x40] sm:$0xff]
  %v243 = vld [vmem:[%s5 + $0x48] sm:$0xff]
  %v244 = vld [vmem:[%s5 + $0x50] sm:$0xff]
  %v245 = vld [vmem:[%s5 + $0x58] sm:$0xff]
  %v246 = vld [vmem:[%s5 + $0x60] sm:$0xff]
  %v247 = vld [vmem:[%s5 + $0x68] sm:$0xff]
  %v248 = vld [vmem:[%s5 + $0x70] sm:$0xff]
  %v249 = vld [vmem:[%s5 + $0x78] sm:$0xff]
  %v250 = vld [vmem:[%s6] sm:$0x1]
  %v252 = vperm.slane %v250, 0
  %254 = vmatpush.msra.mxu0 %v249
  %255 = vmatpush.msra.mxu0 %v248
  %256 = vmatpush.msra.mxu0 %v247
  %257 = vmatpush.msra.mxu0 %v246
  %258 = vmatpush.msra.mxu0 %v245
  %259 = vmatpush.msra.mxu0 %v244
  %260 = vmatpush.msra.mxu0 %v243
  %261 = vmatpush.msra.mxu0 %v242
  %262 = vmatpush.msra.mxu0 %v241
  %263 = vmatpush.msra.mxu0 %v240
  %264 = vmatpush.msra.mxu0 %v239
  %265 = vmatpush.msra.mxu0 %v238
  %266 = vmatpush.msra.mxu0 %v237
  %267 = vmatpush.msra.mxu0 %v236
  %268 = vmatpush.msra.mxu0 %v235
  %269 = vmatpush.msra.mxu0 %v234
  %270 = vmatmul.f32.gmra.mxu0 %v233
  %v271 = vpop.f32.mrf.mxu0
  %v272 = vadd.f32 %v252, %v271
  %273 = vdwg.mxu0
  %274 = vmax.xlane.f32.xlu0 %v272
  %v275 = vpop.xlane.xlu0 %274
  %v276 = vsub.f32 %v272, %v275
  %v277 = vmul.f32 %v276, 1.442695
  %v278 = vpow.pop %v277
  %279 = vadd.xlane.f32.xlu0 %v278
  %v280 = vpop.xlane.xlu0 %279
  %v281 = vlog2.pop %v280
  %v282 = vmul.f32 %v281, 0.6931472
  %v283 = vsub.f32 %v276, %v282
  %284 = vst [vmem:[%s7] sm:$0xff] %v283
  // Predicated region
  $region30: #{firstnet_forward.1} parent=0 // pred_check
    _
  $region31: #{firstnet_forward.1} parent=0 // pred_check_branch
    %286 = sbr.rel (0) target = $region33
  $region32: #{firstnet_forward.1} parent=0 // pred_region
    _
  $region33: #{firstnet_forward.1} parent=0 // pred_fallthru
    _
  // Predicated region
  $region34: #{firstnet_forward.1} parent=0 // pred_check
    _
  $region35: #{firstnet_forward.1} parent=0 // pred_check_branch
    %288 = sbr.rel (0) target = $region37
  $region36: #{firstnet_forward.1} parent=0 // pred_region
    _
  $region37: #{firstnet_forward.1} parent=0 // pred_fallthru
    _

</llo_original>
